<compile_context>
chip_gen: v7x
topology: tpu7x:2x2x1
jax: 0.10.0
libtpu: 0.0.40
codegen_flags: <defaults>
</compile_context>

<pallas_src>
import numpy as np
import jax
import jax.numpy as jnp
from jax import lax
from jax.experimental import pallas as pl
from jax.experimental.pallas import tpu as pltpu


def _round_up(n, m):
    return ((n + m - 1) // m) * m


def _pick_tile(n, max_tile, align):
    """Tile (multiple of `align`, <= max_tile) and padded extent (multiple of tile)."""
    n_al = _round_up(n, align)
    tile = min(max_tile, n_al)
    padded = _round_up(n_al, tile)
    return tile, padded


def _stage1_tile(padded_n, stage2_tile, target=512):
    """Row tile for the projection kernel: ~512 rows, must divide padded_n."""
    if padded_n <= target:
        return padded_n
    if padded_n % target == 0:
        return target
    return stage2_tile  # divides padded_n by construction


# ---------------------------------------------------------------------------
# Stage 1: projection + per-utterance quadratic term
#   inputs : x (tm, D), miu (1, D), M = W @ U_k (D, Kp), Q_hat (Kp, Kp),
#            scale (1, Kp)  (= 2*diag(lambda) for enroll, ones for test)
#   outputs: y (tm, Kp) = (xn @ M) * scale,  s (tm, 1) = diag(y Q y^T) (unscaled y)
# ---------------------------------------------------------------------------
def _project_kernel(x_ref, miu_ref, m_ref, q_ref, scale_ref, y_ref, s_ref):
    xc = x_ref[...] - miu_ref[...]                                    # (tm, D)
    norm = jnp.sqrt(jnp.sum(xc * xc, axis=-1, keepdims=True))         # (tm, 1)
    xn = xc / (norm + 1e-8)                                           # length-normalize rows
    y = jnp.dot(xn, m_ref[...], preferred_element_type=jnp.float32)   # (tm, Kp)
    yq = jnp.dot(y, q_ref[...], preferred_element_type=jnp.float32)   # (tm, Kp)
    s_ref[...] = jnp.sum(y * yq, axis=-1, keepdims=True)              # (tm, 1)
    y_ref[...] = y * scale_ref[...]                                   # fold 2*lambda (enroll side)


# ---------------------------------------------------------------------------
# Stage 2: tiled cross scores
#   scores = ye_scaled @ yt^T + s1 + s2        (ye already carries 2*lambda)
# ---------------------------------------------------------------------------
def _score_kernel(s1_ref, s2_ref, ye_ref, yt_ref, out_ref):
    cross = lax.dot_general(
        ye_ref[...], yt_ref[...],
        dimension_numbers=(((1,), (1,)), ((), ())),                   # contract K, no transpose
        preferred_element_type=jnp.float32)                           # (TM, TN)
    out_ref[...] = cross + s1_ref[...] + s2_ref[...]                  # broadcasts (TM,1),(1,TN)


def gplda_forward(x_enroll, x_test, params):
    """x_enroll: (N1, D), x_test: (N2, D)  (same convention as the PyTorch module)."""
    W = params["W"].astype(jnp.float32)                  # (D, K)
    miu = params["miu"].astype(jnp.float32)              # (D,)
    # lambda_v is diagonal by construction (np.diag(S)); only its diagonal is used.
    lam = jnp.diagonal(params["lambda_v"]).astype(jnp.float32)  # (K,)
    U_k = params["U_k"].astype(jnp.float32)              # (K, K)
    Q_hat = params["Q_hat"].astype(jnp.float32)          # (K, K)

    D = W.shape[0]
    K = U_k.shape[1]
    Kp = _round_up(max(K, 128), 128)                     # MXU contraction dim (keep 128 for K<=128)

    # Host-side algebraic folding + K-padding (padding contributes exact zeros).
    M = W @ U_k                                          # (D, K)
    M_pad = jnp.zeros((D, Kp), jnp.float32).at[:, :K].set(M)
    miu_row = jnp.reshape(miu, (1, D))
    Q_pad = jnp.zeros((Kp, Kp), jnp.float32).at[:K, :K].set(Q_hat)
    lam2 = jnp.zeros((1, Kp), jnp.float32).at[0, :K].set(2.0 * lam)
    ones_scale = jnp.ones((1, Kp), jnp.float32)

    N1, N2 = x_enroll.shape[0], x_test.shape[0]
    # Stage-2 tiles: TM multiple of 8 (sublanes), TN multiple of 128 (lane-dense stores).
    # (1024, 2048) -> ~19 MiB double-buffered, safe within 32 MiB on all generations.
    TM, N1p = _pick_tile(N1, 1024, 8)
    TN, N2p = _pick_tile(N2, 2048, 128)

    cparams_1d = pltpu.CompilerParams(
        dimension_semantics=("parallel",),
        vmem_limit_bytes=32 * 1024 * 1024)

    def project(x, n_padded, stage2_tile, scale_vec):
        n = x.shape[0]
        x32 = x.astype(jnp.float32)
        if n_padded != n:
            # Only the N axis is padded; D stays at its native size (no Dp copy).
            x32 = jnp.zeros((n_padded, D), jnp.float32).at[:n, :].set(x32)
        tm = _stage1_tile(n_padded, stage2_tile)
        y, s = pl.pallas_call(
            _project_kernel,
            out_shape=(jax.ShapeDtypeStruct((n_padded, Kp), jnp.float32),
                       jax.ShapeDtypeStruct((n_padded, 1), jnp.float32)),
            grid=(n_padded // tm,),
            in_specs=[pl.BlockSpec((tm, D), lambda i: (i, 0)),
                      pl.BlockSpec((1, D), lambda i: (0, 0)),
                      pl.BlockSpec((D, Kp), lambda i: (0, 0)),
                      pl.BlockSpec((Kp, Kp), lambda i: (0, 0)),
                      pl.BlockSpec((1, Kp), lambda i: (0, 0))],
            out_specs=(pl.BlockSpec((tm, Kp), lambda i: (i, 0)),
                       pl.BlockSpec((tm, 1), lambda i: (i, 0))),
            compiler_params=cparams_1d,
        )(x32, miu_row, M_pad, Q_pad, scale_vec)
        return y, s

    ye, s1 = project(x_enroll, N1p, TM, lam2)        # ye already scaled by 2*lambda
    yt, s2 = project(x_test, N2p, TN, ones_scale)

    s2_row = jnp.reshape(s2, (1, N2p))               # tiny layout shuffle; lane-major broadcast row

    scores_pad = pl.pallas_call(
        _score_kernel,
        out_shape=jax.ShapeDtypeStruct((N1p, N2p), jnp.float32),
        grid=(N1p // TM, N2p // TN),
        in_specs=[pl.BlockSpec((TM, 1), lambda i, j: (i, 0)),     # s1 tile (col)
                  pl.BlockSpec((1, TN), lambda i, j: (0, j)),     # s2 tile (row)
                  pl.BlockSpec((TM, Kp), lambda i, j: (i, 0)),    # ye tile (scaled)
                  pl.BlockSpec((TN, Kp), lambda i, j: (j, 0))],   # yt tile
        out_specs=pl.BlockSpec((TM, TN), lambda i, j: (i, j)),
        compiler_params=pltpu.CompilerParams(
            dimension_semantics=("parallel", "parallel"),
            vmem_limit_bytes=32 * 1024 * 1024),
    )(s1, s2_row, ye, yt)

    if N1p == N1 and N2p == N2:
        return scores_pad                             # no extra HBM pass when already aligned
    return scores_pad[:N1, :N2]


def make_params(key, feat_dim, n_phi):
    """Deterministic synthetic parameters mirroring GPLDA.__init__ (numpy setup glue)."""
    k1, k2, k3, k4 = jax.random.split(key, 4)
    phi = np.asarray(jax.random.normal(k1, (n_phi, n_phi // 2)),
                     dtype=np.float64) * 0.5
    A = np.asarray(jax.random.normal(k2, (n_phi, n_phi)),
                   dtype=np.float64) * 0.3
    sigma = A @ A.T / n_phi + 0.5 * np.eye(n_phi)
    W = np.asarray(jax.random.normal(k3, (feat_dim, n_phi)),
                   dtype=np.float64) * 0.2
    miu = np.asarray(jax.random.normal(k4, (feat_dim,)), dtype=np.float64)

    sigma_ac = phi @ phi.T
    sigma_tot = sigma_ac + sigma
    inv_sigma_tot = np.linalg.pinv(sigma_tot)
    inv_sigma = np.linalg.pinv(sigma_tot - sigma_ac @ inv_sigma_tot @ sigma_ac)
    Q = inv_sigma_tot - inv_sigma
    P = inv_sigma_tot @ sigma_ac @ inv_sigma
    U, S, _ = np.linalg.svd(P)
    lambda_v = np.diag(S[:n_phi])
    U_k = U[:, :n_phi]
    Q_hat = U_k.T @ Q @ U_k

    return dict(
        W=jnp.asarray(W, dtype=jnp.float32),
        miu=jnp.asarray(miu, dtype=jnp.float32),
        lambda_v=jnp.asarray(lambda_v, dtype=jnp.float32),
        U_k=jnp.asarray(U_k, dtype=jnp.float32),
        Q_hat=jnp.asarray(Q_hat, dtype=jnp.float32),
    )


def _reference(x_enroll, x_test, p):
    """Pure-JAX reference of the PyTorch forward (f32) for a sanity check."""
    def project(x):
        xc = x.T.astype(jnp.float32) - p["miu"][:, None]
        norm = jnp.sqrt(jnp.sum(xc ** 2, axis=0, keepdims=True))
        xn = xc / (norm + 1e-8)
        return p["U_k"].T @ (p["W"].T @ xn)

    ye = project(x_enroll)
    yt = project(x_test)
    s1 = jnp.diag(ye.T @ p["Q_hat"] @ ye)
    s2 = jnp.diag(yt.T @ p["Q_hat"] @ yt)
    return 2.0 * (ye.T @ p["lambda_v"] @ yt) + s1[:, None] + s2[None, :]


if __name__ == "__main__":
    D = 32         # i-vector / embedding feature dim
    K = 16         # n_phi (PLDA latent dim)
    N1, N2 = 8, 8  # number of enroll / test utterances

    key = jax.random.PRNGKey(0)
    k_param, k_e, k_t = jax.random.split(key, 3)
    params = make_params(k_param, D, K)

    x_enroll = jax.random.normal(k_e, (N1, D), dtype=jnp.float32)
    x_test = jax.random.normal(k_t, (N2, D), dtype=jnp.float32)

    scores = gplda_forward(x_enroll, x_test, params)
    scores = jax.block_until_ready(scores)

    ref = jax.block_until_ready(_reference(x_enroll, x_test, params))
    assert scores.shape == (N1, N2)
    assert np.allclose(np.asarray(scores), np.asarray(ref), atol=1e-3, rtol=1e-3), (
        np.max(np.abs(np.asarray(scores) - np.asarray(ref))))

    print("KERNEL_OK")
</pallas_src>

<mosaic_0001>
module attributes {stable_mosaic.version = 11 : i64} {
  func.func @_project_kernel(%arg0: i32, %arg1: memref<8x32xf32, #tpu.memory_space<vmem>>, %arg2: memref<1x32xf32, #tpu.memory_space<vmem>>, %arg3: memref<32x128xf32, #tpu.memory_space<vmem>>, %arg4: memref<128x128xf32, #tpu.memory_space<vmem>>, %arg5: memref<1x128xf32, #tpu.memory_space<vmem>>, %arg6: memref<8x128xf32, #tpu.memory_space<vmem>>, %arg7: memref<8x1xf32, #tpu.memory_space<vmem>>) attributes {dimension_semantics = [#tpu.dimension_semantics<parallel>], iteration_bounds = array<i64: 1>, scalar_prefetch = 0 : i64, scratch_operands = 0 : i64, tpu.core_type = #tpu.core_type<tc>, window_params = [{transform_indices = @transform_0, window_bounds = array<i64: 8, 32>}, {pipeline_mode = #tpu.pipeline_mode<synchronous>, transform_indices = @transform_1, window_bounds = array<i64: 1, 32>}, {pipeline_mode = #tpu.pipeline_mode<synchronous>, transform_indices = @transform_2, window_bounds = array<i64: 32, 128>}, {pipeline_mode = #tpu.pipeline_mode<synchronous>, transform_indices = @transform_3, window_bounds = array<i64: 128, 128>}, {pipeline_mode = #tpu.pipeline_mode<synchronous>, transform_indices = @transform_4, window_bounds = array<i64: 1, 128>}, {transform_indices = @transform_5, window_bounds = array<i64: 8, 128>}, {transform_indices = @transform_6, window_bounds = array<i64: 8, 1>}]} {
    %c0 = arith.constant 0 : index
    %c0_0 = arith.constant 0 : index
    %0 = vector.load %arg1[%c0, %c0_0] : memref<8x32xf32, #tpu.memory_space<vmem>>, vector<8x32xf32>
    %c0_1 = arith.constant 0 : index
    %c0_2 = arith.constant 0 : index
    %1 = vector.load %arg2[%c0_1, %c0_2] : memref<1x32xf32, #tpu.memory_space<vmem>>, vector<1x32xf32>
    %2 = vector.broadcast %1 : vector<1x32xf32> to vector<8x32xf32>
    %3 = arith.subf %0, %2 : vector<8x32xf32>
    %4 = arith.mulf %3, %3 : vector<8x32xf32>
    %cst = arith.constant dense<0.000000e+00> : vector<8xf32>
    %5 = vector.multi_reduction <add>, %4, %cst [1] : vector<8x32xf32> to vector<8xf32>
    %6 = vector.shape_cast %5 : vector<8xf32> to vector<8x1xf32>
    %7 = math.sqrt %6 : vector<8x1xf32>
    %cst_3 = arith.constant 9.99999993E-9 : f32
    %8 = vector.broadcast %cst_3 : f32 to vector<8x1xf32>
    %9 = arith.addf %7, %8 : vector<8x1xf32>
    %10 = vector.broadcast %9 : vector<8x1xf32> to vector<8x32xf32>
    %11 = arith.divf %3, %10 : vector<8x32xf32>
    %c0_4 = arith.constant 0 : index
    %c0_5 = arith.constant 0 : index
    %12 = vector.load %arg3[%c0_4, %c0_5] : memref<32x128xf32, #tpu.memory_space<vmem>>, vector<32x128xf32>
    %cst_6 = arith.constant dense<0.000000e+00> : vector<8x128xf32>
    %13 = tpu.matmul %11, %12, %cst_6 {dimension_numbers = #tpu.dot_dimension_numbers<[1], [0], [0], [1], [0, 0, 1, 1], [], []>} : vector<8x32xf32>, vector<32x128xf32>, vector<8x128xf32> -> vector<8x128xf32>
    %c0_7 = arith.constant 0 : index
    %c0_8 = arith.constant 0 : index
    %14 = vector.load %arg4[%c0_7, %c0_8] : memref<128x128xf32, #tpu.memory_space<vmem>>, vector<128x128xf32>
    %cst_9 = arith.constant dense<0.000000e+00> : vector<8x128xf32>
    %15 = tpu.matmul %13, %14, %cst_9 {dimension_numbers = #tpu.dot_dimension_numbers<[1], [0], [0], [1], [0, 0, 1, 1], [], []>} : vector<8x128xf32>, vector<128x128xf32>, vector<8x128xf32> -> vector<8x128xf32>
    %16 = arith.mulf %13, %15 : vector<8x128xf32>
    %cst_10 = arith.constant dense<0.000000e+00> : vector<8xf32>
    %17 = vector.multi_reduction <add>, %16, %cst_10 [1] : vector<8x128xf32> to vector<8xf32>
    %18 = vector.shape_cast %17 : vector<8xf32> to vector<8x1xf32>
    %c0_11 = arith.constant 0 : index
    %c0_12 = arith.constant 0 : index
    %19 = vector.load %arg7[%c0_11, %c0_12] : memref<8x1xf32, #tpu.memory_space<vmem>>, vector<8x1xf32>
    tpu.vector_store %arg7[%c0_11, %c0_12], %18 {strides = array<i32>} : memref<8x1xf32, #tpu.memory_space<vmem>>, vector<8x1xf32>,
    %c0_13 = arith.constant 0 : index
    %c0_14 = arith.constant 0 : index
    %20 = vector.load %arg5[%c0_13, %c0_14] : memref<1x128xf32, #tpu.memory_space<vmem>>, vector<1x128xf32>
    %21 = vector.broadcast %20 : vector<1x128xf32> to vector<8x128xf32>
    %22 = arith.mulf %13, %21 : vector<8x128xf32>
    %c0_15 = arith.constant 0 : index
    %c0_16 = arith.constant 0 : index
    %23 = vector.load %arg6[%c0_15, %c0_16] : memref<8x128xf32, #tpu.memory_space<vmem>>, vector<8x128xf32>
    tpu.vector_store %arg6[%c0_15, %c0_16], %22 {strides = array<i32>} : memref<8x128xf32, #tpu.memory_space<vmem>>, vector<8x128xf32>,
    return
  }
  func.func @transform_0(%arg0: i32) -> (i32, i32) {
    %c0_i32 = arith.constant 0 : i32
    %c0_i32_0 = arith.constant 0 : i32
    return %arg0, %c0_i32 : i32, i32
  }
  func.func @transform_1(%arg0: i32) -> (i32, i32) {
    %c0_i32 = arith.constant 0 : i32
    %c0_i32_0 = arith.constant 0 : i32
    %c0_i32_1 = arith.constant 0 : i32
    return %c0_i32, %c0_i32_0 : i32, i32
  }
  func.func @transform_2(%arg0: i32) -> (i32, i32) {
    %c0_i32 = arith.constant 0 : i32
    %c0_i32_0 = arith.constant 0 : i32
    %c0_i32_1 = arith.constant 0 : i32
    return %c0_i32, %c0_i32_0 : i32, i32
  }
  func.func @transform_3(%arg0: i32) -> (i32, i32) {
    %c0_i32 = arith.constant 0 : i32
    %c0_i32_0 = arith.constant 0 : i32
    %c0_i32_1 = arith.constant 0 : i32
    return %c0_i32, %c0_i32_0 : i32, i32
  }
  func.func @transform_4(%arg0: i32) -> (i32, i32) {
    %c0_i32 = arith.constant 0 : i32
    %c0_i32_0 = arith.constant 0 : i32
    %c0_i32_1 = arith.constant 0 : i32
    return %c0_i32, %c0_i32_0 : i32, i32
  }
  func.func @transform_5(%arg0: i32) -> (i32, i32) {
    %c0_i32 = arith.constant 0 : i32
    %c0_i32_0 = arith.constant 0 : i32
    return %arg0, %c0_i32 : i32, i32
  }
  func.func @transform_6(%arg0: i32) -> (i32, i32) {
    %c0_i32 = arith.constant 0 : i32
    %c0_i32_0 = arith.constant 0 : i32
    return %arg0, %c0_i32 : i32, i32
  }
}

</mosaic_0001>

<llo_original>
// kernel: tpu_custom_call.1
$region0: #{tpu_custom_call.1}
  #allocation0 [shape = 'u32[]', space=smem, size = 0x4, offset = 0x4, fixed_abs, tag = 'smem constant byte address 0x4 - core index']
  #allocation1 [shape = 'u32[144,128]{1,0:T(1,128)}', space=vmem, size = 0x12000, scoped, tag = 'internal scratch']
  %s0 = inlined_call_operand.hbm [shape: f32[8,32], index: 0, kind: input, shape index: {}]
  %s1 = inlined_call_operand.vmem [shape: f32[1,32], index: 1, kind: input, shape index: {}]
  %s2 = inlined_call_operand.hbm [shape: f32[32,128], index: 2, kind: input, shape index: {}]
  %s3 = inlined_call_operand.hbm [shape: f32[128,128], index: 3, kind: input, shape index: {}]
  %s4 = inlined_call_operand.vmem [shape: f32[1,128], index: 4, kind: input, shape index: {}]
  %s5 = inlined_call_operand.hbm [shape: f32[8,128], index: 5, kind: output, shape index: {0}]
  %s6 = inlined_call_operand.vmem [shape: f32[8,1], index: 6, kind: output, shape index: {1}]
  %7 = xla_tuple %s5, %s6
  %s8 = sld [smem:[#allocation0]]
  $region50: #{tpu_custom_call.1} parent=0
    _
  %s10 = ssub.s32 1, %s8
  %s11 = scalar_select 0, %s10, %s8
  $region1: #{tpu_custom_call.1} parent=0
    #allocation2 [shape = 'u8[4096]{0}', space=vmem, size = 0x1000, scoped, tag = 'input window, operand 0, single buffered']
    #allocation3 [shape = 's32[1]{0}', space=sflag, size = 0x4, scoped, tag = 'scoped memory for tpu_custom_call.1']
    #allocation4 [shape = 's32[1]{0}', space=sflag, size = 0x4, scoped, tag = 'scoped memory for tpu_custom_call.1']
    #allocation5 [shape = 'u8[16384]{0}', space=vmem, size = 0x4000, scoped, tag = 'input window, operand 2, single buffered']
    #allocation6 [shape = 's32[1]{0}', space=sflag, size = 0x4, scoped, tag = 'scoped memory for tpu_custom_call.1']
    #allocation7 [shape = 'u8[65536]{0}', space=vmem, size = 0x10000, scoped, tag = 'input window, operand 3, single buffered']
    #allocation8 [shape = 'u8[4096]{0}', space=vmem, size = 0x1000, scoped, tag = 'output window, operand 0, single buffered']
    %12 = vsyncpa [#allocation3], 0
    %13 = vsyncpa [#allocation6], 0
    %14 = vsyncpa [#allocation4], 0
    // Predicated region
    $region2: #{tpu_custom_call.1} parent=1 // pred_check
      _
    $region3: #{tpu_custom_call.1} parent=1 // pred_check_branch
      %16 = sbr.rel (0) target = $region5
    $region4: #{tpu_custom_call.1} parent=1 // pred_region
      %s18 = ssub.s32 128, 128
      %19 = vsyncadd [#allocation3], %s18
      %s21 = sshll.u32 [#allocation2], 4
      %s22 = int_to_ptr.vmem [resolvable:$true] %s21
      %24 = dma.hbm_to_vmem [thread:$0]  %s0, 128, %s22, [#allocation3]
    $region5: #{tpu_custom_call.1} parent=1 // pred_fallthru
      _
    // Predicated region
    $region6: #{tpu_custom_call.1} parent=1 // pred_check
      _
    $region7: #{tpu_custom_call.1} parent=1 // pred_check_branch
      %26 = sbr.rel (0) target = $region9
    $region8: #{tpu_custom_call.1} parent=1 // pred_region
      _
    $region9: #{tpu_custom_call.1} parent=1 // pred_fallthru
      _
    // Predicated region
    $region10: #{tpu_custom_call.1} parent=1 // pred_check
      _
    $region11: #{tpu_custom_call.1} parent=1 // pred_check_branch
      %28 = sbr.rel (0) target = $region13
    $region12: #{tpu_custom_call.1} parent=1 // pred_region
      %s30 = ssub.s32 512, 512
      %31 = vsyncadd [#allocation6], %s30
      %s32 = sshll.u32 [#allocation5], 4
      %s33 = int_to_ptr.vmem [resolvable:$true] %s32
      %38 = dma.hbm_to_vmem [thread:$0]  %s2, 512, %s33, [#allocation6], 128, 128, 8
    $region13: #{tpu_custom_call.1} parent=1 // pred_fallthru
      _
    // Predicated region
    $region14: #{tpu_custom_call.1} parent=1 // pred_check
      _
    $region15: #{tpu_custom_call.1} parent=1 // pred_check_branch
      %40 = sbr.rel (0) target = $region17
    $region16: #{tpu_custom_call.1} parent=1 // pred_region
      %s42 = ssub.s32 2048, 2048
      %43 = vsyncadd [#allocation6], %s42
      %s44 = sshll.u32 [#allocation7], 4
      %s45 = int_to_ptr.vmem [resolvable:$true] %s44
      %50 = dma.hbm_to_vmem [thread:$0]  %s3, 2048, %s45, [#allocation6], 128, 128, 8
    $region17: #{tpu_custom_call.1} parent=1 // pred_fallthru
      _
    // Predicated region
    $region18: #{tpu_custom_call.1} parent=1 // pred_check
      _
    $region19: #{tpu_custom_call.1} parent=1 // pred_check_branch
      %52 = sbr.rel (0) target = $region21
    $region20: #{tpu_custom_call.1} parent=1 // pred_region
      _
    $region21: #{tpu_custom_call.1} parent=1 // pred_fallthru
      _
    // Predicated region
    $region22: #{tpu_custom_call.1} parent=1 // pred_check
      _
    $region23: #{tpu_custom_call.1} parent=1 // pred_check_branch
      %54 = sbr.rel (0) target = $region25
    $region24: #{tpu_custom_call.1} parent=1 // pred_region
      %55 = dma.done [#allocation3], 128
    $region25: #{tpu_custom_call.1} parent=1 // pred_fallthru
      _
    // Predicated region
    $region26: #{tpu_custom_call.1} parent=1 // pred_check
      _
    $region27: #{tpu_custom_call.1} parent=1 // pred_check_branch
      %57 = sbr.rel (0) target = $region29
    $region28: #{tpu_custom_call.1} parent=1 // pred_region
      %58 = dma.done [#allocation6], 512
    $region29: #{tpu_custom_call.1} parent=1 // pred_fallthru
      _
    // Predicated region
    $region30: #{tpu_custom_call.1} parent=1 // pred_check
      _
    $region31: #{tpu_custom_call.1} parent=1 // pred_check_branch
      %60 = sbr.rel (0) target = $region33
    $region32: #{tpu_custom_call.1} parent=1 // pred_region
      %61 = dma.done [#allocation6], 2048
    $region33: #{tpu_custom_call.1} parent=1 // pred_fallthru
      _
    %v62 = vld [vmem:[#allocation2] sm:$0xff]
    %v63 = vld [vmem:[%s1] sm:$0x1]
    %v65 = vlaneseq
    %v66 = vshrl.u32 %v65, 7
    %v67 = vsub.s32 0, %v66
    %v68 = vrot.slane %v63, %v67
    %v70 = vsub.f32 %v62, %v68
    %v71 = vmul.f32 %v70, %v70
    %vm72 = vcmask 261120
    %v73 = vsel %vm72, %v71, 0.0
    %74 = vadd.xlane.f32.xlu0 %v73
    %v75 = vpop.xlane.xlu0 %74
    %v76 = vrsqrt.pop %v75
    %v77 = vmul.f32 %v75, %v76
    %vm78 = vcmp.eq.f32.partialorder %v75, inf
    %v79 = vsel %vm78, %v75, %v77
    %vm80 = vcmp.eq.f32.partialorder %v75, 0.0
    %v81 = vand.u32 %v75, 2147483648
    %v82 = vsel %vm80, %v81, %v79
    %v83 = vadd.f32 %v82, 1e-08
    %v84 = vrcp.pop %v83
    %v85 = vmul.f32 %v70, %v84
    %v86 = vld [vmem:[#allocation5] sm:$0xff]
    %v87 = vld [vmem:[#allocation5 + $0x8] sm:$0xff]
    %v88 = vld [vmem:[#allocation5 + $0x10] sm:$0xff]
    %v89 = vld [vmem:[#allocation5 + $0x18] sm:$0xff]
    %v91 = vsel %vm72, %v85, 0
    %93 = vmatprep.subr.mxu0 0.0
    %94 = vmatpush1.msra.mxu0 %v86
    %95 = vmatprep.subr.mxu0 0.0
    %96 = vmatpush1.msra.mxu0 %v87
    %97 = vmatprep.subr.mxu0 0.0
    %98 = vmatpush1.msra.mxu0 %v88
    %99 = vmatprep.subr.mxu0 0.0
    %100 = vmatpush1.msra.mxu0 %v89
    %101 = vmatprep.subr.mxu0 0.0
    %102 = vmatpush1.msra.mxu0 0.0
    %103 = vmatprep.subr.mxu0 0.0
    %104 = vmatpush1.msra.mxu0 0.0
    %105 = vmatprep.subr.mxu0 0.0
    %106 = vmatpush1.msra.mxu0 0.0
    %107 = vmatprep.subr.mxu0 0.0
    %108 = vmatpush1.msra.mxu0 0.0
    %109 = vmatprep.subr.mxu0 0.0
    %110 = vmatpush1.msra.mxu0 0.0
    %111 = vmatprep.subr.mxu0 0.0
    %112 = vmatpush1.msra.mxu0 0.0
    %113 = vmatprep.subr.mxu0 0.0
    %114 = vmatpush1.msra.mxu0 0.0
    %115 = vmatprep.subr.mxu0 0.0
    %116 = vmatpush1.msra.mxu0 0.0
    %117 = vmatprep.subr.mxu0 0.0
    %118 = vmatpush1.msra.mxu0 0.0
    %119 = vmatprep.subr.mxu0 0.0
    %120 = vmatpush1.msra.mxu0 0.0
    %121 = vmatprep.subr.mxu0 0.0
    %122 = vmatpush1.msra.mxu0 0.0
    %123 = vmatprep.subr.mxu0 0.0
    %124 = vmatpush1.msra.mxu0 0.0
    %125 = vmatprep.subr.mxu0 0.0
    %126 = vmatpush1.msra.mxu0 0.0
    %127 = vmatprep.subr.mxu0 0.0
    %128 = vmatpush1.msra.mxu0 0.0
    %129 = vmatprep.subr.mxu0 0.0
    %130 = vmatpush1.msra.mxu0 0.0
    %131 = vmatprep.subr.mxu0 0.0
    %132 = vmatpush1.msra.mxu0 0.0
    %133 = vmatprep.subr.mxu0 0.0
    %134 = vmatpush1.msra.mxu0 0.0
    %135 = vmatprep.subr.mxu0 0.0
    %136 = vmatpush1.msra.mxu0 0.0
    %137 = vmatprep.subr.mxu0 0.0
    %138 = vmatpush1.msra.mxu0 0.0
    %139 = vmatprep.subr.mxu0 0.0
    %140 = vmatpush1.msra.mxu0 0.0
    %141 = vmatprep.subr.mxu0 0.0
    %142 = vmatpush1.msra.mxu0 0.0
    %143 = vmatprep.subr.mxu0 0.0
    %144 = vmatpush1.msra.mxu0 0.0
    %145 = vmatprep.subr.mxu0 0.0
    %146 = vmatpush1.msra.mxu0 0.0
    %147 = vmatprep.subr.mxu0 0.0
    %148 = vmatpush1.msra.mxu0 0.0
    %149 = vmatprep.subr.mxu0 0.0
    %150 = vmatpush1.msra.mxu0 0.0
    %151 = vmatprep.subr.mxu0 0.0
    %152 = vmatpush1.msra.mxu0 0.0
    %153 = vmatprep.subr.mxu0 0.0
    %154 = vmatpush1.msra.mxu0 0.0
    %155 = vmatprep.subr.mxu0 0.0
    %156 = vmatpush1.msra.mxu0 0.0
    %157 = vmatprep.mubr.f32.mxu0 0.0
    %158 = vmatmul.mubr.f32.gmra.mrb[0].mxu0 %v91
    %v159 = vpop.f32.mrb[0].mxu0
    %v160 = vadd.f32 0.0, %v159
    %v161 = vpop.f32.mrb[0].mxu0
    %162 = vdwg.mxu0
    %v163 = vld [vmem:[#allocation7] sm:$0xff]
    %v164 = vld [vmem:[#allocation7 + $0x8] sm:$0xff]
    %v165 = vld [vmem:[#allocation7 + $0x10] sm:$0xff]
    %v166 = vld [vmem:[#allocation7 + $0x18] sm:$0xff]
    %v167 = vld [vmem:[#allocation7 + $0x20] sm:$0xff]
    %v168 = vld [vmem:[#allocation7 + $0x28] sm:$0xff]
    %v169 = vld [vmem:[#allocation7 + $0x30] sm:$0xff]
    %v170 = vld [vmem:[#allocation7 + $0x38] sm:$0xff]
    %v171 = vld [vmem:[#allocation7 + $0x40] sm:$0xff]
    %v172 = vld [vmem:[#allocation7 + $0x48] sm:$0xff]
    %v173 = vld [vmem:[#allocation7 + $0x50] sm:$0xff]
    %v174 = vld [vmem:[#allocation7 + $0x58] sm:$0xff]
    %v175 = vld [vmem:[#allocation7 + $0x60] sm:$0xff]
    %v176 = vld [vmem:[#allocation7 + $0x68] sm:$0xff]
    %v177 = vld [vmem:[#allocation7 + $0x70] sm:$0xff]
    %v178 = vld [vmem:[#allocation7 + $0x78] sm:$0xff]
    %179 = vmatprep.subr.mxu0 0.0
    %180 = vmatpush1.msra.mxu0 %v163
    %181 = vmatprep.subr.mxu0 0.0
    %182 = vmatpush1.msra.mxu0 %v164
    %183 = vmatprep.subr.mxu0 0.0
    %184 = vmatpush1.msra.mxu0 %v165
    %185 = vmatprep.subr.mxu0 0.0
    %186 = vmatpush1.msra.mxu0 %v166
    %187 = vmatprep.subr.mxu0 0.0
    %188 = vmatpush1.msra.mxu0 %v167
    %189 = vmatprep.subr.mxu0 0.0
    %190 = vmatpush1.msra.mxu0 %v168
    %191 = vmatprep.subr.mxu0 0.0
    %192 = vmatpush1.msra.mxu0 %v169
    %193 = vmatprep.subr.mxu0 0.0
    %194 = vmatpush1.msra.mxu0 %v170
    %195 = vmatprep.subr.mxu0 0.0
    %196 = vmatpush1.msra.mxu0 %v171
    %197 = vmatprep.subr.mxu0 0.0
    %198 = vmatpush1.msra.mxu0 %v172
    %199 = vmatprep.subr.mxu0 0.0
    %200 = vmatpush1.msra.mxu0 %v173
    %201 = vmatprep.subr.mxu0 0.0
    %202 = vmatpush1.msra.mxu0 %v174
    %203 = vmatprep.subr.mxu0 0.0
    %204 = vmatpush1.msra.mxu0 %v175
    %205 = vmatprep.subr.mxu0 0.0
    %206 = vmatpush1.msra.mxu0 %v176
    %207 = vmatprep.subr.mxu0 0.0
    %208 = vmatpush1.msra.mxu0 %v177
    %209 = vmatprep.subr.mxu0 0.0
    %210 = vmatpush1.msra.mxu0 %v178
    %211 = vmatprep.subr.mxu0 0.0
    %212 = vmatpush1.msra.mxu0 0.0
    %213 = vmatprep.subr.mxu0 0.0
    %214 = vmatpush1.msra.mxu0 0.0
    %215 = vmatprep.subr.mxu0 0.0
    %216 = vmatpush1.msra.mxu0 0.0
    %217 = vmatprep.subr.mxu0 0.0
    %218 = vmatpush1.msra.mxu0 0.0
    %219 = vmatprep.subr.mxu0 0.0
    %220 = vmatpush1.msra.mxu0 0.0
    %221 = vmatprep.subr.mxu0 0.0
    %222 = vmatpush1.msra.mxu0 0.0
    %223 = vmatprep.subr.mxu0 0.0
    %224 = vmatpush1.msra.mxu0 0.0
    %225 = vmatprep.subr.mxu0 0.0
    %226 = vmatpush1.msra.mxu0 0.0
    %227 = vmatprep.subr.mxu0 0.0
    %228 = vmatpush1.msra.mxu0 0.0
    %229 = vmatprep.subr.mxu0 0.0
    %230 = vmatpush1.msra.mxu0 0.0
    %231 = vmatprep.subr.mxu0 0.0
    %232 = vmatpush1.msra.mxu0 0.0
    %233 = vmatprep.subr.mxu0 0.0
    %234 = vmatpush1.msra.mxu0 0.0
    %235 = vmatprep.subr.mxu0 0.0
    %236 = vmatpush1.msra.mxu0 0.0
    %237 = vmatprep.subr.mxu0 0.0
    %238 = vmatpush1.msra.mxu0 0.0
    %239 = vmatprep.subr.mxu0 0.0
    %240 = vmatpush1.msra.mxu0 0.0
    %241 = vmatprep.subr.mxu0 0.0
    %242 = vmatpush1.msra.mxu0 0.0
    %243 = vmatprep.mubr.f32.mxu0 0.0
    %244 = vmatmul.mubr.f32.gmra.mrb[0].mxu0 %v160
    %v245 = vpop.f32.mrb[0].mxu0
    %v246 = vadd.f32 0.0, %v245
    %v247 = vpop.f32.mrb[0].mxu0
    %248 = vdwg.mxu0
    %v249 = vmul.f32 %v160, %v246
    %250 = vadd.xlane.f32.xlu0 %v249
    %v251 = vpop.xlane.xlu0 %250
    %vm252 = vcmask 7168
    %253 = vst.msk [vmem:[%s6] sm:$0xff] %vm252, %v251
    %v254 = vld [vmem:[%s4] sm:$0x1]
    %v256 = vlaneseq
    %v257 = vshrl.u32 %v256, 7
    %v258 = vsub.s32 0, %v257
    %v259 = vrot.slane %v254, %v258
    %v261 = vmul.f32 %v160, %v259
    %262 = vst [vmem:[#allocation8] sm:$0xff] %v261
    // Predicated region
    $region34: #{tpu_custom_call.1} parent=1 // pred_check
      _
    $region35: #{tpu_custom_call.1} parent=1 // pred_check_branch
      %264 = sbr.rel (0) target = $region37
    $region36: #{tpu_custom_call.1} parent=1 // pred_region
      %s266 = ssub.s32 128, 128
      %267 = vsyncadd [#allocation4], %s266
      %s269 = sshll.u32 [#allocation8], 4
      %s270 = int_to_ptr.vmem [resolvable:$true] %s269
      %272 = dma.vmem_to_hbm [thread:$0]  %s270, 128, %s5, [#allocation4]
    $region37: #{tpu_custom_call.1} parent=1 // pred_fallthru
      _
    // Predicated region
    $region38: #{tpu_custom_call.1} parent=1 // pred_check
      _
    $region39: #{tpu_custom_call.1} parent=1 // pred_check_branch
      %274 = sbr.rel (0) target = $region41
    $region40: #{tpu_custom_call.1} parent=1 // pred_region
      _
    $region41: #{tpu_custom_call.1} parent=1 // pred_fallthru
      _
    // Predicated region
    $region42: #{tpu_custom_call.1} parent=1 // pred_check
      _
    $region43: #{tpu_custom_call.1} parent=1 // pred_check_branch
      %276 = sbr.rel (0) target = $region45
    $region44: #{tpu_custom_call.1} parent=1 // pred_region
      %277 = dma.done [#allocation4], 128
    $region45: #{tpu_custom_call.1} parent=1 // pred_fallthru
      _
    // Predicated region
    $region46: #{tpu_custom_call.1} parent=1 // pred_check
      _
    $region47: #{tpu_custom_call.1} parent=1 // pred_check_branch
      %279 = sbr.rel (0) target = $region49
    $region48: #{tpu_custom_call.1} parent=1 // pred_region
      _
    $region49: #{tpu_custom_call.1} parent=1 // pred_fallthru
      _
    %280 = vsyncpa [#allocation3], 1
    %281 = vsyncpa [#allocation6], 1
    %282 = vsyncpa [#allocation4], 1

</llo_original>
